<compile_context>
chip_gen: v6e
topology: v6e:2x2x1
jax: 0.10.0
libtpu: 0.0.40
codegen_flags: <defaults>
</compile_context>

<pallas_src>
import functools

import jax
import jax.numpy as jnp
from jax import lax
from jax.experimental import pallas as pl
from jax.experimental.pallas import tpu as pltpu

_LANE = 128
_TM = 256  # GEMM rows per grid step (v6e/v7x MXU cadence; v5e may prefer 128).


def _round_up(x, m):
    return (x + m - 1) // m * m


def _gemm_bn_kernel(x_ref, w_ref, scale_ref, bias_ref, o_ref):
    """One grid step: (TM, K_p) x (K_p, Cout_p) GEMM + eval-mode BN epilogue.

    x_ref:     (TM, K_p)      bf16 im2col rows (K = KH*KW*Cin, zero-padded).
    w_ref:     (K_p, Cout_p)  bf16 reshaped conv weights (constant over grid,
                              DMA'd once and revisited every step).
    scale_ref: (1, Cout_p)    f32 BN scale  = gamma / sqrt(running_var + eps).
    bias_ref:  (1, Cout_p)    f32 BN bias   = beta - running_mean * scale.
    o_ref:     (TM, Cout_p)   bf16 output tile (lane-dense last dim).
    """
    acc = jnp.dot(x_ref[...], w_ref[...], preferred_element_type=jnp.float32)
    # BN applied in f32 (v5e has no bf16 VALU; robust even for tiny
    # running_var).  ReLU intentionally NOT applied, matching forward().
    o_ref[...] = (acc * scale_ref[...] + bias_ref[...]).astype(o_ref.dtype)


@functools.partial(jax.jit,
                   static_argnames=("stride", "padding", "dilation", "eps"))
def basic_conv2d(x_nchw, weight_oihw, gamma, beta, running_mean, running_var,
                 *, stride=1, padding=0, dilation=1, eps=1e-5):
    """BasicConv2d.forward: conv2d(bias=False) -> BatchNorm2d (eval). No ReLU.

    Accepts/returns PyTorch NCHW / OIHW layouts; the Pallas kernel runs a
    lane-dense im2col GEMM.
    TODO(synk): training-mode BN (batch statistics over N,H,W) is not computed
    in-kernel; eval-mode (running stats) semantics are used.
    """
    N, Cin, H, W = x_nchw.shape
    Cout, Cin_w, KH, KW = weight_oihw.shape
    assert Cin == Cin_w

    Ho = (H + 2 * padding - dilation * (KH - 1) - 1) // stride + 1
    Wo = (W + 2 * padding - dilation * (KW - 1) - 1) // stride + 1
    K = KH * KW * Cin
    K_p = _round_up(K, _LANE)
    cout_p = _round_up(Cout, _LANE)
    M_total = N * Ho * Wo
    TM = _TM if M_total >= _TM else _round_up(M_total, 8)
    M_p = _round_up(M_total, TM)
    # TODO(synk): for very large Cin (K_p >> 1024) add a K grid axis with a
    # VMEM accumulator instead of a single-block K contraction.

    # --- eval-mode BatchNorm, computed in f32, applied in the kernel epilogue.
    scale = gamma.astype(jnp.float32) * lax.rsqrt(
        running_var.astype(jnp.float32) + eps)
    bias = beta.astype(jnp.float32) - running_mean.astype(jnp.float32) * scale
    scale_p = jnp.pad(scale, (0, cout_p - Cout)).reshape(1, cout_p)
    bias_p = jnp.pad(bias, (0, cout_p - Cout)).reshape(1, cout_p)

    # --- im2col in the jitted wrapper (fused XLA ops): stride / dilation /
    # spatial padding are folded here so the kernel sees a plain, lane-dense
    # GEMM operand with K on the lane axis.
    x = jnp.transpose(x_nchw, (0, 2, 3, 1)).astype(jnp.float32)
    x = jnp.pad(x, ((0, 0), (padding, padding), (padding, padding), (0, 0)))
    taps = []
    for kh in range(KH):
        for kw in range(KW):
            h0, w0 = kh * dilation, kw * dilation
            taps.append(lax.slice(
                x,
                (0, h0, w0, 0),
                (N, h0 + (Ho - 1) * stride + 1,
                 w0 + (Wo - 1) * stride + 1, Cin),
                (1, stride, stride, 1)))                    # (N, Ho, Wo, Cin)
    cols = jnp.concatenate(taps, axis=-1).reshape(M_total, K)
    cols = jnp.pad(cols,
                   ((0, M_p - M_total), (0, K_p - K))).astype(jnp.bfloat16)

    # --- weights: OIHW -> (KH*KW*Cin, Cout), row order matches the tap/cin
    # order of `cols` above; zero-padded to (K_p, Cout_p), bf16.
    w = jnp.transpose(weight_oihw, (2, 3, 1, 0)).reshape(K, Cout)
    w = jnp.pad(w, ((0, K_p - K), (0, cout_p - Cout))).astype(jnp.bfloat16)

    cost = pl.CostEstimate(
        flops=2 * M_total * K * Cout,
        transcendentals=0,
        bytes_accessed=(cols.size * 2 + w.size * 2
                        + (scale_p.size + bias_p.size) * 4
                        + M_p * cout_p * 2))

    out = pl.pallas_call(
        _gemm_bn_kernel,
        out_shape=jax.ShapeDtypeStruct((M_p, cout_p), jnp.bfloat16),
        grid=(M_p // TM,),
        in_specs=[
            pl.BlockSpec((TM, K_p), lambda m: (m, 0)),
            # Constant along the grid: DMA'd once, revisited every step.
            pl.BlockSpec((K_p, cout_p), lambda m: (0, 0)),
            pl.BlockSpec((1, cout_p), lambda m: (0, 0)),
            pl.BlockSpec((1, cout_p), lambda m: (0, 0)),
        ],
        out_specs=pl.BlockSpec((TM, cout_p), lambda m: (m, 0)),
        compiler_params=pltpu.CompilerParams(
            dimension_semantics=("parallel",)),
        cost_estimate=cost,
    )(cols, w, scale_p, bias_p)

    # Drop M/Cout padding, back to NCHW f32 (all fused into the same jit).
    out = out[:M_total, :Cout].reshape(N, Ho, Wo, Cout).astype(jnp.float32)
    return jnp.transpose(out, (0, 3, 1, 2))


def _reference(x_nchw, weight_oihw, gamma, beta, running_mean, running_var,
               *, stride, padding, dilation, eps=1e-5):
    """Pure f32 reference with exact PyTorch eval-mode semantics."""
    y = lax.conv_general_dilated(
        x_nchw.astype(jnp.float32), weight_oihw.astype(jnp.float32),
        window_strides=(stride, stride),
        padding=[(padding, padding), (padding, padding)],
        rhs_dilation=(dilation, dilation),
        dimension_numbers=("NCHW", "OIHW", "NCHW"))
    scale = gamma / jnp.sqrt(running_var + eps)
    bias = beta - running_mean * scale
    return y * scale[None, :, None, None] + bias[None, :, None, None]


if __name__ == "__main__":
    in_planes, out_planes, kernel_size = 4, 8, 3

    key = jax.random.PRNGKey(0)
    kx, kw, kg, kb, km, kv = jax.random.split(key, 6)

    # Input: NCHW, batch=2, channels=4, spatial=16.
    x = jax.random.normal(kx, (2, in_planes, 16, 16), dtype=jnp.float32)

    # Deterministic parameters (shapes from nn.Conv2d / nn.BatchNorm2d).
    weight = jax.random.normal(
        kw, (out_planes, in_planes, kernel_size, kernel_size),
        dtype=jnp.float32) * 0.1
    gamma = 1.0 + 0.1 * jax.random.normal(kg, (out_planes,), dtype=jnp.float32)
    beta = 0.1 * jax.random.normal(kb, (out_planes,), dtype=jnp.float32)
    running_mean = 0.1 * jax.random.normal(km, (out_planes,), dtype=jnp.float32)
    running_var = jnp.abs(
        1.0 + 0.1 * jax.random.normal(kv, (out_planes,), dtype=jnp.float32))

    # Exercise stride-1 (main config) plus a strided/dilated config, both
    # checked against the exact f32 reference.
    configs = [
        dict(stride=1, padding=1, dilation=1),   # 16x16 -> 16x16
        dict(stride=2, padding=2, dilation=2),   # 16x16 -> 8x8
    ]
    for cfg in configs:
        out = basic_conv2d(x, weight, gamma, beta, running_mean, running_var,
                           **cfg)
        out = jax.block_until_ready(out)
        ref = _reference(x, weight, gamma, beta, running_mean, running_var,
                         **cfg)
        assert out.shape == ref.shape, (out.shape, ref.shape, cfg)
        # Tolerance sized for bf16 operand/output rounding (f32 accumulation).
        assert jnp.allclose(out, ref, rtol=2e-2, atol=2e-2), f"mismatch {cfg}"

    print("KERNEL_OK")
</pallas_src>

<mosaic_0001>
module attributes {stable_mosaic.version = 11 : i64} {
  func.func @_gemm_bn_kernel(%arg0: i32, %arg1: memref<256x128xbf16, #tpu.memory_space<vmem>>, %arg2: memref<128x128xbf16, #tpu.memory_space<vmem>>, %arg3: memref<1x128xf32, #tpu.memory_space<vmem>>, %arg4: memref<1x128xf32, #tpu.memory_space<vmem>>, %arg5: memref<256x128xbf16, #tpu.memory_space<vmem>>) attributes {dimension_semantics = [#tpu.dimension_semantics<parallel>], iteration_bounds = array<i64: 2>, scalar_prefetch = 0 : i64, scratch_operands = 0 : i64, tpu.core_type = #tpu.core_type<tc>, window_params = [{transform_indices = @transform_0, window_bounds = array<i64: 256, 128>}, {pipeline_mode = #tpu.pipeline_mode<synchronous>, transform_indices = @transform_1, window_bounds = array<i64: 128, 128>}, {pipeline_mode = #tpu.pipeline_mode<synchronous>, transform_indices = @transform_2, window_bounds = array<i64: 1, 128>}, {pipeline_mode = #tpu.pipeline_mode<synchronous>, transform_indices = @transform_3, window_bounds = array<i64: 1, 128>}, {transform_indices = @transform_4, window_bounds = array<i64: 256, 128>}]} {
    %c0 = arith.constant 0 : index
    %c0_0 = arith.constant 0 : index
    %0 = vector.load %arg1[%c0, %c0_0] : memref<256x128xbf16, #tpu.memory_space<vmem>>, vector<256x128xbf16>
    %c0_1 = arith.constant 0 : index
    %c0_2 = arith.constant 0 : index
    %1 = vector.load %arg2[%c0_1, %c0_2] : memref<128x128xbf16, #tpu.memory_space<vmem>>, vector<128x128xbf16>
    %cst = arith.constant dense<0.000000e+00> : vector<256x128xf32>
    %2 = tpu.matmul %0, %1, %cst {dimension_numbers = #tpu.dot_dimension_numbers<[1], [0], [0], [1], [0, 0, 1, 1], [], []>} : vector<256x128xbf16>, vector<128x128xbf16>, vector<256x128xf32> -> vector<256x128xf32>
    %c0_3 = arith.constant 0 : index
    %c0_4 = arith.constant 0 : index
    %3 = vector.load %arg3[%c0_3, %c0_4] : memref<1x128xf32, #tpu.memory_space<vmem>>, vector<1x128xf32>
    %4 = vector.broadcast %3 : vector<1x128xf32> to vector<256x128xf32>
    %5 = arith.mulf %2, %4 : vector<256x128xf32>
    %c0_5 = arith.constant 0 : index
    %c0_6 = arith.constant 0 : index
    %6 = vector.load %arg4[%c0_5, %c0_6] : memref<1x128xf32, #tpu.memory_space<vmem>>, vector<1x128xf32>
    %7 = vector.broadcast %6 : vector<1x128xf32> to vector<256x128xf32>
    %8 = arith.addf %5, %7 : vector<256x128xf32>
    %9 = arith.truncf %8 : vector<256x128xf32> to vector<256x128xbf16>
    %c0_7 = arith.constant 0 : index
    %c0_8 = arith.constant 0 : index
    %10 = vector.load %arg5[%c0_7, %c0_8] : memref<256x128xbf16, #tpu.memory_space<vmem>>, vector<256x128xbf16>
    tpu.vector_store %arg5[%c0_7, %c0_8], %9 {strides = array<i32>} : memref<256x128xbf16, #tpu.memory_space<vmem>>, vector<256x128xbf16>,
    return
  }
  func.func @transform_0(%arg0: i32) -> (i32, i32) {
    %c0_i32 = arith.constant 0 : i32
    %c0_i32_0 = arith.constant 0 : i32
    return %arg0, %c0_i32 : i32, i32
  }
  func.func @transform_1(%arg0: i32) -> (i32, i32) {
    %c0_i32 = arith.constant 0 : i32
    %c0_i32_0 = arith.constant 0 : i32
    %c0_i32_1 = arith.constant 0 : i32
    return %c0_i32, %c0_i32_0 : i32, i32
  }
  func.func @transform_2(%arg0: i32) -> (i32, i32) {
    %c0_i32 = arith.constant 0 : i32
    %c0_i32_0 = arith.constant 0 : i32
    %c0_i32_1 = arith.constant 0 : i32
    return %c0_i32, %c0_i32_0 : i32, i32
  }
  func.func @transform_3(%arg0: i32) -> (i32, i32) {
    %c0_i32 = arith.constant 0 : i32
    %c0_i32_0 = arith.constant 0 : i32
    %c0_i32_1 = arith.constant 0 : i32
    return %c0_i32, %c0_i32_0 : i32, i32
  }
  func.func @transform_4(%arg0: i32) -> (i32, i32) {
    %c0_i32 = arith.constant 0 : i32
    %c0_i32_0 = arith.constant 0 : i32
    return %arg0, %c0_i32 : i32, i32
  }
}

</mosaic_0001>

<llo_original>
// kernel: basic_conv2d.1
$region0: #{basic_conv2d.1}
  #allocation0 [shape = 'u32[]', space=smem, size = 0x4, offset = 0x4, fixed_abs, tag = 'smem constant byte address 0x4 - core index']
  #allocation1 [shape = 'u32[144,128]{1,0:T(1,128)}', space=vmem, size = 0x12000, scoped, tag = 'internal scratch']
  %s0 = inlined_call_operand.vmem [shape: bf16[512,128], index: 0, kind: input, shape index: {}]
  %s1 = inlined_call_operand.vmem [shape: bf16[128,128], index: 1, kind: input, shape index: {}]
  %s2 = inlined_call_operand.vmem [shape: f32[1,128], index: 2, kind: input, shape index: {}]
  %s3 = inlined_call_operand.vmem [shape: f32[1,128], index: 3, kind: input, shape index: {}]
  %s4 = inlined_call_operand.vmem [shape: bf16[512,128], index: 4, kind: output, shape index: {}]
  %s5 = sld [smem:[#allocation0]]
  $region49: #{basic_conv2d.1} parent=0
    _
  %s7 = ssub.s32 1, %s5
  %s8 = scalar_select 0, %s7, %s5
  loop: start=0, step=1, limit=4
  $region2: #{basic_conv2d.1} parent=0 // loop_pre_header
    _
  $region3: #{basic_conv2d.1} parent=0 // loop_header
    %s10 = sphi 0, %s14
    %p11 = scmp.ge.s32.totalorder %s10, 4
    %s20 = sphi 0, %s22
    %s23 = sphi 0, %s20
    %s24 = sphi 0, %s23
    %s40 = sphi 0, %s24
    %s44 = sphi 0, %s44
    %s46 = sphi 0, %s44
    %s47 = sphi 0, %s46
    %s61 = sphi 0, %s47
    %s65 = sphi 0, %s65
    %s67 = sphi 0, %s65
    %s68 = sphi 0, %s67
    %s82 = sphi 0, %s68
    %s86 = sphi 0, %s86
    %s88 = sphi 0, %s86
    %s89 = sphi 0, %s88
    %s103 = sphi 0, %s89
    %s109 = sphi 0, %s111
    %s112 = sphi 0, %s109
    %s113 = sphi 0, %s112
    %s129 = sphi 0, %s113
  $region4: #{basic_conv2d.1} parent=0 // loop_header_branch
    %13 = sbr.rel (%p11) target = $region8
  $region5: #{basic_conv2d.1} parent=0 // loop_body
    %s15 = ssub.s32 %s10, 1
    %s16 = ssub.s32 %s10, 2
    %s17 = sadd.s32 %s10, 1
    %s18 = ssub.s32 %s10, %s17
    %p19 = scmp.eq.s32.totalorder %s18, 0
    %s21 = sadd.s32 %s20, 1
    %s22 = scalar_select %p19, %s20, %s21
    %p25 = pneg %p19
    %p26 = scmp.eq.s32.totalorder %s10, 1
    %p27 = por %p25, %p26
    %p28 = scmp.ne.s32.totalorder %s20, %s23
    %p29 = scmp.eq.s32.totalorder %s10, 0
    %p30 = por %p28, %p29
    %p31 = scmp.ne.s32.totalorder %s20, %s23
    %p32 = scmp.eq.s32.totalorder %s15, 1
    %p33 = por %p31, %p32
    %p34 = scmp.ne.s32.totalorder %s23, %s24
    %p35 = scmp.eq.s32.totalorder %s15, 0
    %p36 = por %p34, %p35
    %p37 = scmp.ne.s32.totalorder %s23, %s24
    %p38 = scmp.eq.s32.totalorder %s16, 1
    %p39 = por %p37, %p38
    %p41 = scmp.ne.s32.totalorder %s24, %s40
    %p42 = scmp.eq.s32.totalorder %s16, 0
    %p43 = por %p41, %p42
    %s45 = sadd.s32 %s44, 1
    %p48 = scmp.eq.s32.totalorder %s10, 1
    %p49 = scmp.ne.s32.totalorder %s44, %s46
    %p50 = scmp.eq.s32.totalorder %s10, 0
    %p51 = por %p49, %p50
    %p52 = scmp.ne.s32.totalorder %s44, %s46
    %p53 = scmp.eq.s32.totalorder %s15, 1
    %p54 = por %p52, %p53
    %p55 = scmp.ne.s32.totalorder %s46, %s47
    %p56 = scmp.eq.s32.totalorder %s15, 0
    %p57 = por %p55, %p56
    %p58 = scmp.ne.s32.totalorder %s46, %s47
    %p59 = scmp.eq.s32.totalorder %s16, 1
    %p60 = por %p58, %p59
    %p62 = scmp.ne.s32.totalorder %s47, %s61
    %p63 = scmp.eq.s32.totalorder %s16, 0
    %p64 = por %p62, %p63
    %s66 = sadd.s32 %s65, 1
    %p69 = scmp.eq.s32.totalorder %s10, 1
    %p70 = scmp.ne.s32.totalorder %s65, %s67
    %p71 = scmp.eq.s32.totalorder %s10, 0
    %p72 = por %p70, %p71
    %p73 = scmp.ne.s32.totalorder %s65, %s67
    %p74 = scmp.eq.s32.totalorder %s15, 1
    %p75 = por %p73, %p74
    %p76 = scmp.ne.s32.totalorder %s67, %s68
    %p77 = scmp.eq.s32.totalorder %s15, 0
    %p78 = por %p76, %p77
    %p79 = scmp.ne.s32.totalorder %s67, %s68
    %p80 = scmp.eq.s32.totalorder %s16, 1
    %p81 = por %p79, %p80
    %p83 = scmp.ne.s32.totalorder %s68, %s82
    %p84 = scmp.eq.s32.totalorder %s16, 0
    %p85 = por %p83, %p84
    %s87 = sadd.s32 %s86, 1
    %p90 = scmp.eq.s32.totalorder %s10, 1
    %p91 = scmp.ne.s32.totalorder %s86, %s88
    %p92 = scmp.eq.s32.totalorder %s10, 0
    %p93 = por %p91, %p92
    %p94 = scmp.ne.s32.totalorder %s86, %s88
    %p95 = scmp.eq.s32.totalorder %s15, 1
    %p96 = por %p94, %p95
    %p97 = scmp.ne.s32.totalorder %s88, %s89
    %p98 = scmp.eq.s32.totalorder %s15, 0
    %p99 = por %p97, %p98
    %p100 = scmp.ne.s32.totalorder %s88, %s89
    %p101 = scmp.eq.s32.totalorder %s16, 1
    %p102 = por %p100, %p101
    %p104 = scmp.ne.s32.totalorder %s89, %s103
    %p105 = scmp.eq.s32.totalorder %s16, 0
    %p106 = por %p104, %p105
    %s107 = ssub.s32 %s10, %s17
    %p108 = scmp.eq.s32.totalorder %s107, 0
    %s110 = sadd.s32 %s109, 1
    %s111 = scalar_select %p108, %s109, %s110
    %p114 = pneg %p108
    %p115 = scmp.eq.s32.totalorder %s10, 1
    %p116 = por %p114, %p115
    %p117 = scmp.ne.s32.totalorder %s109, %s112
    %p118 = scmp.eq.s32.totalorder %s10, 0
    %p119 = por %p117, %p118
    %p120 = scmp.ne.s32.totalorder %s109, %s112
    %p121 = scmp.eq.s32.totalorder %s15, 1
    %p122 = por %p120, %p121
    %p123 = scmp.ne.s32.totalorder %s112, %s113
    %p124 = scmp.eq.s32.totalorder %s15, 0
    %p125 = por %p123, %p124
    %p126 = scmp.ne.s32.totalorder %s112, %s113
    %p127 = scmp.eq.s32.totalorder %s16, 1
    %p128 = por %p126, %p127
    %p130 = scmp.ne.s32.totalorder %s113, %s129
    %p131 = scmp.eq.s32.totalorder %s16, 0
    %p132 = por %p130, %p131
    %p133 = scmp.le.s32.totalorder 1, %s10
    %p134 = scmp.lt.s32.totalorder %s10, 3
    %p135 = pnand %p133, %p134
    %p136 = pneg %p135
    // Predicated region
    $region9: #{basic_conv2d.1} parent=5 // pred_check
      _
    $region10: #{basic_conv2d.1} parent=5 // pred_check_branch
      %138 = sbr.rel (%p135) target = $region12
    $region11: #{basic_conv2d.1} parent=5 // pred_region
      %s139 = ssub.s32 %s10, 1
      // Predicated region
      $region13: #{basic_conv2d.1} parent=11 // pred_check
        %p140 = pneg %p57
      $region14: #{basic_conv2d.1} parent=11 // pred_check_branch
        %142 = sbr.rel (%p140) target = $region16
      $region15: #{basic_conv2d.1} parent=11 // pred_region
        _
      $region16: #{basic_conv2d.1} parent=11 // pred_fallthru
        _
      // Predicated region
      $region17: #{basic_conv2d.1} parent=11 // pred_check
        %p143 = pneg %p78
      $region18: #{basic_conv2d.1} parent=11 // pred_check_branch
        %145 = sbr.rel (%p143) target = $region20
      $region19: #{basic_conv2d.1} parent=11 // pred_region
        _
      $region20: #{basic_conv2d.1} parent=11 // pred_fallthru
        _
      // Predicated region
      $region21: #{basic_conv2d.1} parent=11 // pred_check
        %p146 = pneg %p99
      $region22: #{basic_conv2d.1} parent=11 // pred_check_branch
        %148 = sbr.rel (%p146) target = $region24
      $region23: #{basic_conv2d.1} parent=11 // pred_region
        _
      $region24: #{basic_conv2d.1} parent=11 // pred_fallthru
        _
    $region12: #{basic_conv2d.1} parent=5 // pred_fallthru
      _
    %p149 = scmp.lt.s32.totalorder %s10, 2
    // Predicated region
    $region25: #{basic_conv2d.1} parent=5 // pred_check
      %p150 = pneg %p149
    $region26: #{basic_conv2d.1} parent=5 // pred_check_branch
      %152 = sbr.rel (%p150) target = $region28
    $region27: #{basic_conv2d.1} parent=5 // pred_region
      // Predicated region
      $region29: #{basic_conv2d.1} parent=27 // pred_check
        %p153 = pneg %p30
      $region30: #{basic_conv2d.1} parent=27 // pred_check_branch
        %155 = sbr.rel (%p153) target = $region32
      $region31: #{basic_conv2d.1} parent=27 // pred_region
        %s156 = smul.u32 32, %s10
        %p157 = scmp.lt.s32.totalorder %s156, 63
        %s158 = scalar_select %p157, %s156, 63
        %s159 = smul.addr %s158, 4
        %s160 = scalar_lea.vmem %s0, %s159
        %s161 = smul.u32 32, %s10
      $region32: #{basic_conv2d.1} parent=27 // pred_fallthru
        _
    $region28: #{basic_conv2d.1} parent=5 // pred_fallthru
      _
    %p162 = scmp.le.s32.totalorder 1, %s10
    %p163 = scmp.lt.s32.totalorder %s10, 3
    %p164 = pnand %p162, %p163
    %p165 = pneg %p164
    // Predicated region
    $region33: #{basic_conv2d.1} parent=5 // pred_check
      _
    $region34: #{basic_conv2d.1} parent=5 // pred_check_branch
      %167 = sbr.rel (%p164) target = $region36
    $region35: #{basic_conv2d.1} parent=5 // pred_region
      %s168 = ssub.s32 %s10, 1
      %s169 = smul.u32 32, %s15
      %p170 = scmp.lt.s32.totalorder %s169, 63
      %s171 = scalar_select %p170, %s169, 63
      %s172 = smul.addr %s171, 4
      %s173 = scalar_lea.vmem %s0, %s172
      %p174 = pneg %p36
      %p175 = pneg %p33
      %p176 = pneg %p57
      %p177 = pneg %p54
      %p178 = pneg %p78
      %p179 = pneg %p75
      %p180 = pneg %p99
      %p181 = pneg %p96
      %p182 = pneg %p125
      %p183 = pneg %p122
      %s184 = smul.u32 32, %s15
      %p185 = scmp.lt.s32.totalorder %s184, 63
      %s186 = scalar_select %p185, %s184, 63
      %s187 = smul.addr %s186, 4
      %s188 = scalar_lea.vmem %s4, %s187
      %s189 = smul.u32 32, %s15
      %p190 = scmp.lt.s32.totalorder %s189, 63
      %s191 = scalar_select %p190, %s189, 63
      %s192 = smul.addr %s191, 4
      %s193 = scalar_lea.vmem %s0, %s192
      %s194 = smul.u32 32, %s15
      %s195 = smul.u32 32, %s15
      %p196 = scmp.lt.s32.totalorder %s195, 63
      %s197 = scalar_select %p196, %s195, 63
      %s198 = smul.addr %s197, 4
      %s199 = scalar_lea.vmem %s4, %s198
      %s200 = smul.u32 32, %s15
      %v202 = vld [vmem:[%s193] sm:$0xf]
      %v203 = vld [vmem:[%s193 + $0x4] sm:$0xf]
      %v204 = vld [vmem:[%s193 + $0x8] sm:$0xf]
      %v205 = vld [vmem:[%s193 + $0xc] sm:$0xf]
      %v206 = vld [vmem:[%s193 + $0x10] sm:$0xf]
      %v207 = vld [vmem:[%s193 + $0x14] sm:$0xf]
      %v208 = vld [vmem:[%s193 + $0x18] sm:$0xf]
      %v209 = vld [vmem:[%s193 + $0x1c] sm:$0xf]
      %v210 = vld [vmem:[%s193 + $0x20] sm:$0xf]
      %v211 = vld [vmem:[%s193 + $0x24] sm:$0xf]
      %v212 = vld [vmem:[%s193 + $0x28] sm:$0xf]
      %v213 = vld [vmem:[%s193 + $0x2c] sm:$0xf]
      %v214 = vld [vmem:[%s193 + $0x30] sm:$0xf]
      %v215 = vld [vmem:[%s193 + $0x34] sm:$0xf]
      %v216 = vld [vmem:[%s193 + $0x38] sm:$0xf]
      %v217 = vld [vmem:[%s193 + $0x3c] sm:$0xf]
      %v218 = vld [vmem:[%s193 + $0x40] sm:$0xf]
      %v219 = vld [vmem:[%s193 + $0x44] sm:$0xf]
      %v220 = vld [vmem:[%s193 + $0x48] sm:$0xf]
      %v221 = vld [vmem:[%s193 + $0x4c] sm:$0xf]
      %v222 = vld [vmem:[%s193 + $0x50] sm:$0xf]
      %v223 = vld [vmem:[%s193 + $0x54] sm:$0xf]
      %v224 = vld [vmem:[%s193 + $0x58] sm:$0xf]
      %v225 = vld [vmem:[%s193 + $0x5c] sm:$0xf]
      %v226 = vld [vmem:[%s193 + $0x60] sm:$0xf]
      %v227 = vld [vmem:[%s193 + $0x64] sm:$0xf]
      %v228 = vld [vmem:[%s193 + $0x68] sm:$0xf]
      %v229 = vld [vmem:[%s193 + $0x6c] sm:$0xf]
      %v230 = vld [vmem:[%s193 + $0x70] sm:$0xf]
      %v231 = vld [vmem:[%s193 + $0x74] sm:$0xf]
      %v232 = vld [vmem:[%s193 + $0x78] sm:$0xf]
      %v233 = vld [vmem:[%s193 + $0x7c] sm:$0xf]
      %v234 = vld [vmem:[%s1] sm:$0xf]
      %v235 = vld [vmem:[%s1 + $0x4] sm:$0xf]
      %v236 = vld [vmem:[%s1 + $0x8] sm:$0xf]
      %v237 = vld [vmem:[%s1 + $0xc] sm:$0xf]
      %v238 = vld [vmem:[%s1 + $0x10] sm:$0xf]
      %v239 = vld [vmem:[%s1 + $0x14] sm:$0xf]
      %v240 = vld [vmem:[%s1 + $0x18] sm:$0xf]
      %v241 = vld [vmem:[%s1 + $0x1c] sm:$0xf]
      %v242 = vld [vmem:[%s1 + $0x20] sm:$0xf]
      %v243 = vld [vmem:[%s1 + $0x24] sm:$0xf]
      %v244 = vld [vmem:[%s1 + $0x28] sm:$0xf]
      %v245 = vld [vmem:[%s1 + $0x2c] sm:$0xf]
      %v246 = vld [vmem:[%s1 + $0x30] sm:$0xf]
      %v247 = vld [vmem:[%s1 + $0x34] sm:$0xf]
      %v248 = vld [vmem:[%s1 + $0x38] sm:$0xf]
      %v249 = vld [vmem:[%s1 + $0x3c] sm:$0xf]
      %v282 = vunpack.c.l.b16 %v202
      %v283 = vunpack.c.l.b16 %v203
      %v284 = vunpack.c.l.b16 %v204
      %v285 = vunpack.c.l.b16 %v205
      %v286 = vunpack.c.l.b16 %v206
      %v287 = vunpack.c.l.b16 %v207
      %v288 = vunpack.c.l.b16 %v208
      %v289 = vunpack.c.l.b16 %v209
      %v290 = vunpack.c.l.b16 %v210
      %v291 = vunpack.c.l.b16 %v211
      %v292 = vunpack.c.l.b16 %v212
      %v293 = vunpack.c.l.b16 %v213
      %v294 = vunpack.c.l.b16 %v214
      %v295 = vunpack.c.l.b16 %v215
      %v296 = vunpack.c.l.b16 %v216
      %v297 = vunpack.c.l.b16 %v217
      %v298 = vunpack.c.l.b16 %v218
      %v299 = vunpack.c.l.b16 %v219
      %v300 = vunpack.c.l.b16 %v220
      %v301 = vunpack.c.l.b16 %v221
      %v302 = vunpack.c.l.b16 %v222
      %v303 = vunpack.c.l.b16 %v223
      %v304 = vunpack.c.l.b16 %v224
      %v305 = vunpack.c.l.b16 %v225
      %v306 = vunpack.c.l.b16 %v226
      %v307 = vunpack.c.l.b16 %v227
      %v308 = vunpack.c.l.b16 %v228
      %v309 = vunpack.c.l.b16 %v229
      %v310 = vunpack.c.l.b16 %v230
      %v311 = vunpack.c.l.b16 %v231
      %v312 = vunpack.c.l.b16 %v232
      %v313 = vunpack.c.l.b16 %v233
      %v314 = vpack.c.b16 %v283, %v282
      %v315 = vpack.c.b16 %v285, %v284
      %v316 = vpack.c.b16 %v287, %v286
      %v317 = vpack.c.b16 %v289, %v288
      %v318 = vpack.c.b16 %v291, %v290
      %v319 = vpack.c.b16 %v293, %v292
      %v320 = vpack.c.b16 %v295, %v294
      %v321 = vpack.c.b16 %v297, %v296
      %v322 = vpack.c.b16 %v299, %v298
      %v323 = vpack.c.b16 %v301, %v300
      %v324 = vpack.c.b16 %v303, %v302
      %v325 = vpack.c.b16 %v305, %v304
      %v326 = vpack.c.b16 %v307, %v306
      %v327 = vpack.c.b16 %v309, %v308
      %v328 = vpack.c.b16 %v311, %v310
      %v329 = vpack.c.b16 %v313, %v312
      %v362 = vunpack.c.l.b16 %v234
      %v363 = vunpack.c.l.b16 %v235
      %v364 = vunpack.c.l.b16 %v236
      %v365 = vunpack.c.l.b16 %v237
      %v366 = vunpack.c.l.b16 %v238
      %v367 = vunpack.c.l.b16 %v239
      %v368 = vunpack.c.l.b16 %v240
      %v369 = vunpack.c.l.b16 %v241
      %v370 = vunpack.c.l.b16 %v242
      %v371 = vunpack.c.l.b16 %v243
      %v372 = vunpack.c.l.b16 %v244
      %v373 = vunpack.c.l.b16 %v245
      %v374 = vunpack.c.l.b16 %v246
      %v375 = vunpack.c.l.b16 %v247
      %v376 = vunpack.c.l.b16 %v248
      %v377 = vunpack.c.l.b16 %v249
      %v378 = vpack.c.b16 %v363, %v362
      %v379 = vpack.c.b16 %v365, %v364
      %v380 = vpack.c.b16 %v367, %v366
      %v381 = vpack.c.b16 %v369, %v368
      %v382 = vpack.c.b16 %v371, %v370
      %v383 = vpack.c.b16 %v373, %v372
      %v384 = vpack.c.b16 %v375, %v374
      %v385 = vpack.c.b16 %v377, %v376
      %394 = vmatprep.subr.bf16.mxu0 0
      %395 = vmatpush1.bf16.msra.mxu0 %v385
      %396 = vmatprep.subr.bf16.mxu0 0
      %397 = vmatpush1.bf16.msra.mxu0 %v384
      %398 = vmatprep.subr.bf16.mxu0 0
      %399 = vmatpush1.bf16.msra.mxu0 %v383
      %400 = vmatprep.subr.bf16.mxu0 0
      %401 = vmatpush1.bf16.msra.mxu0 %v382
      %402 = vmatprep.subr.bf16.mxu0 0
      %403 = vmatpush1.bf16.msra.mxu0 %v381
      %404 = vmatprep.subr.bf16.mxu0 0
      %405 = vmatpush1.bf16.msra.mxu0 %v380
      %406 = vmatprep.subr.bf16.mxu0 0
      %407 = vmatpush1.bf16.msra.mxu0 %v379
      %408 = vmatprep.subr.bf16.mxu0 0
      %409 = vmatpush1.bf16.msra.mxu0 %v378
      %410 = vmatprep.subr.bf16.mxu0 0
      %411 = vmatpush2.bf16.msra.mxu0 0
      %412 = vmatprep.subr.bf16.mxu0 0
      %413 = vmatpush2.bf16.msra.mxu0 0
      %414 = vmatprep.subr.bf16.mxu0 0
      %415 = vmatpush2.bf16.msra.mxu0 0
      %416 = vmatprep.subr.bf16.mxu0 0
      %417 = vmatpush2.bf16.msra.mxu0 0
      %418 = vmatprep.subr.bf16.mxu0 0
      %419 = vmatpush2.bf16.msra.mxu0 0
      %420 = vmatprep.subr.bf16.mxu0 0
      %421 = vmatpush2.bf16.msra.mxu0 0
      %422 = vmatprep.subr.bf16.mxu0 0
      %423 = vmatpush2.bf16.msra.mxu0 0
      %424 = vmatprep.subr.bf16.mxu0 0
      %425 = vmatpush2.bf16.msra.mxu0 0
      %426 = vmatprep.mubr.bf16.mxu0 0
      %427 = vmatmul.mubr.bf16.gmra.mxu0 %v314
      %v428 = vpop.f32.mrf.mxu0
      %v429 = vadd.f32 0.0, %v428
      %v430 = vpop.f32.mrf.mxu0
      %v431 = vpop.f32.mrf.mxu0
      %v432 = vadd.f32 0.0, %v431
      %v433 = vpop.f32.mrf.mxu0
      %434 = vmatprep.mubr.bf16.mxu0 0
      %435 = vmatmul.mubr.bf16.gmra.mxu0 %v315
      %v436 = vpop.f32.mrf.mxu0
      %v437 = vadd.f32 0.0, %v436
      %v438 = vpop.f32.mrf.mxu0
      %v439 = vpop.f32.mrf.mxu0
      %v440 = vadd.f32 0.0, %v439
      %v441 = vpop.f32.mrf.mxu0
      %442 = vmatprep.mubr.bf16.mxu0 0
      %443 = vmatmul.mubr.bf16.gmra.mxu0 %v316
      %v444 = vpop.f32.mrf.mxu0
      %v445 = vadd.f32 0.0, %v444
      %v446 = vpop.f32.mrf.mxu0
      %v447 = vpop.f32.mrf.mxu0
      %v448 = vadd.f32 0.0, %v447
      %v449 = vpop.f32.mrf.mxu0
      %450 = vmatprep.mubr.bf16.mxu0 0
      %451 = vmatmul.mubr.bf16.gmra.mxu0 %v317
      %v452 = vpop.f32.mrf.mxu0
      %v453 = vadd.f32 0.0, %v452
      %v454 = vpop.f32.mrf.mxu0
      %v455 = vpop.f32.mrf.mxu0
      %v456 = vadd.f32 0.0, %v455
      %v457 = vpop.f32.mrf.mxu0
      %458 = vmatprep.mubr.bf16.mxu0 0
      %459 = vmatmul.mubr.bf16.gmra.mxu0 %v318
      %v460 = vpop.f32.mrf.mxu0
      %v461 = vadd.f32 0.0, %v460
      %v462 = vpop.f32.mrf.mxu0
      %v463 = vpop.f32.mrf.mxu0
      %v464 = vadd.f32 0.0, %v463
      %v465 = vpop.f32.mrf.mxu0
      %466 = vmatprep.mubr.bf16.mxu0 0
      %467 = vmatmul.mubr.bf16.gmra.mxu0 %v319
      %v468 = vpop.f32.mrf.mxu0
      %v469 = vadd.f32 0.0, %v468
      %v470 = vpop.f32.mrf.mxu0
      %v471 = vpop.f32.mrf.mxu0
      %v472 = vadd.f32 0.0, %v471
      %v473 = vpop.f32.mrf.mxu0
      %474 = vmatprep.mubr.bf16.mxu0 0
      %475 = vmatmul.mubr.bf16.gmra.mxu0 %v320
      %v476 = vpop.f32.mrf.mxu0
      %v477 = vadd.f32 0.0, %v476
      %v478 = vpop.f32.mrf.mxu0
      %v479 = vpop.f32.mrf.mxu0
      %v480 = vadd.f32 0.0, %v479
      %v481 = vpop.f32.mrf.mxu0
      %482 = vmatprep.mubr.bf16.mxu0 0
      %483 = vmatmul.mubr.bf16.gmra.mxu0 %v321
      %v484 = vpop.f32.mrf.mxu0
      %v485 = vadd.f32 0.0, %v484
      %v486 = vpop.f32.mrf.mxu0
      %v487 = vpop.f32.mrf.mxu0
      %v488 = vadd.f32 0.0, %v487
      %v489 = vpop.f32.mrf.mxu0
      %490 = vmatprep.mubr.bf16.mxu0 0
      %491 = vmatmul.mubr.bf16.gmra.mxu0 %v322
      %v492 = vpop.f32.mrf.mxu0
      %v493 = vadd.f32 0.0, %v492
      %v494 = vpop.f32.mrf.mxu0
      %v495 = vpop.f32.mrf.mxu0
      %v496 = vadd.f32 0.0, %v495
      %v497 = vpop.f32.mrf.mxu0
      %498 = vmatprep.mubr.bf16.mxu0 0
      %499 = vmatmul.mubr.bf16.gmra.mxu0 %v323
      %v500 = vpop.f32.mrf.mxu0
      %v501 = vadd.f32 0.0, %v500
      %v502 = vpop.f32.mrf.mxu0
      %v503 = vpop.f32.mrf.mxu0
      %v504 = vadd.f32 0.0, %v503
      %v505 = vpop.f32.mrf.mxu0
      %506 = vmatprep.mubr.bf16.mxu0 0
      %507 = vmatmul.mubr.bf16.gmra.mxu0 %v324
      %v508 = vpop.f32.mrf.mxu0
      %v509 = vadd.f32 0.0, %v508
      %v510 = vpop.f32.mrf.mxu0
      %v511 = vpop.f32.mrf.mxu0
      %v512 = vadd.f32 0.0, %v511
      %v513 = vpop.f32.mrf.mxu0
      %514 = vmatprep.mubr.bf16.mxu0 0
      %515 = vmatmul.mubr.bf16.gmra.mxu0 %v325
      %v516 = vpop.f32.mrf.mxu0
      %v517 = vadd.f32 0.0, %v516
      %v518 = vpop.f32.mrf.mxu0
      %v519 = vpop.f32.mrf.mxu0
      %v520 = vadd.f32 0.0, %v519
      %v521 = vpop.f32.mrf.mxu0
      %522 = vmatprep.mubr.bf16.mxu0 0
      %523 = vmatmul.mubr.bf16.gmra.mxu0 %v326
      %v524 = vpop.f32.mrf.mxu0
      %v525 = vadd.f32 0.0, %v524
      %v526 = vpop.f32.mrf.mxu0
      %v527 = vpop.f32.mrf.mxu0
      %v528 = vadd.f32 0.0, %v527
      %v529 = vpop.f32.mrf.mxu0
      %530 = vmatprep.mubr.bf16.mxu0 0
      %531 = vmatmul.mubr.bf16.gmra.mxu0 %v327
      %v532 = vpop.f32.mrf.mxu0
      %v533 = vadd.f32 0.0, %v532
      %v534 = vpop.f32.mrf.mxu0
      %v535 = vpop.f32.mrf.mxu0
      %v536 = vadd.f32 0.0, %v535
      %v537 = vpop.f32.mrf.mxu0
      %538 = vmatprep.mubr.bf16.mxu0 0
      %539 = vmatmul.mubr.bf16.gmra.mxu0 %v328
      %v540 = vpop.f32.mrf.mxu0
      %v541 = vadd.f32 0.0, %v540
      %v542 = vpop.f32.mrf.mxu0
      %v543 = vpop.f32.mrf.mxu0
      %v544 = vadd.f32 0.0, %v543
      %v545 = vpop.f32.mrf.mxu0
      %546 = vmatprep.mubr.bf16.mxu0 0
      %547 = vmatmul.mubr.bf16.gmra.mxu0 %v329
      %v548 = vpop.f32.mrf.mxu0
      %v549 = vadd.f32 0.0, %v548
      %v550 = vpop.f32.mrf.mxu0
      %v551 = vpop.f32.mrf.mxu0
      %v552 = vadd.f32 0.0, %v551
      %v553 = vpop.f32.mrf.mxu0
      %554 = vdwg.mxu0
      %v555 = vld [vmem:[%s2] sm:$0x1]
      %v557 = vlaneseq
      %v558 = vshrl.u32 %v557, 7
      %v559 = vsub.s32 0, %v558
      %v560 = vrot.slane %v555, %v559
      %v562 = vmul.f32 %v429, %v560
      %v563 = vmul.f32 %v432, %v560
      %v564 = vmul.f32 %v437, %v560
      %v565 = vmul.f32 %v440, %v560
      %v566 = vmul.f32 %v445, %v560
      %v567 = vmul.f32 %v448, %v560
      %v568 = vmul.f32 %v453, %v560
      %v569 = vmul.f32 %v456, %v560
      %v570 = vmul.f32 %v461, %v560
      %v571 = vmul.f32 %v464, %v560
      %v572 = vmul.f32 %v469, %v560
      %v573 = vmul.f32 %v472, %v560
      %v574 = vmul.f32 %v477, %v560
      %v575 = vmul.f32 %v480, %v560
      %v576 = vmul.f32 %v485, %v560
      %v577 = vmul.f32 %v488, %v560
      %v578 = vmul.f32 %v493, %v560
      %v579 = vmul.f32 %v496, %v560
      %v580 = vmul.f32 %v501, %v560
      %v581 = vmul.f32 %v504, %v560
      %v582 = vmul.f32 %v509, %v560
      %v583 = vmul.f32 %v512, %v560
      %v584 = vmul.f32 %v517, %v560
      %v585 = vmul.f32 %v520, %v560
      %v586 = vmul.f32 %v525, %v560
      %v587 = vmul.f32 %v528, %v560
      %v588 = vmul.f32 %v533, %v560
      %v589 = vmul.f32 %v536, %v560
      %v590 = vmul.f32 %v541, %v560
      %v591 = vmul.f32 %v544, %v560
      %v592 = vmul.f32 %v549, %v560
      %v593 = vmul.f32 %v552, %v560
      %v594 = vld [vmem:[%s3] sm:$0x1]
      %v596 = vlaneseq
      %v597 = vshrl.u32 %v596, 7
      %v598 = vsub.s32 0, %v597
      %v599 = vrot.slane %v594, %v598
      %v601 = vadd.f32 %v562, %v599
      %v602 = vadd.f32 %v563, %v599
      %v603 = vadd.f32 %v564, %v599
      %v604 = vadd.f32 %v565, %v599
      %v605 = vadd.f32 %v566, %v599
      %v606 = vadd.f32 %v567, %v599
      %v607 = vadd.f32 %v568, %v599
      %v608 = vadd.f32 %v569, %v599
      %v609 = vadd.f32 %v570, %v599
      %v610 = vadd.f32 %v571, %v599
      %v611 = vadd.f32 %v572, %v599
      %v612 = vadd.f32 %v573, %v599
      %v613 = vadd.f32 %v574, %v599
      %v614 = vadd.f32 %v575, %v599
      %v615 = vadd.f32 %v576, %v599
      %v616 = vadd.f32 %v577, %v599
      %v617 = vadd.f32 %v578, %v599
      %v618 = vadd.f32 %v579, %v599
      %v619 = vadd.f32 %v580, %v599
      %v620 = vadd.f32 %v581, %v599
      %v621 = vadd.f32 %v582, %v599
      %v622 = vadd.f32 %v583, %v599
      %v623 = vadd.f32 %v584, %v599
      %v624 = vadd.f32 %v585, %v599
      %v625 = vadd.f32 %v586, %v599
      %v626 = vadd.f32 %v587, %v599
      %v627 = vadd.f32 %v588, %v599
      %v628 = vadd.f32 %v589, %v599
      %v629 = vadd.f32 %v590, %v599
      %v630 = vadd.f32 %v591, %v599
      %v631 = vadd.f32 %v592, %v599
      %v632 = vadd.f32 %v593, %v599
      %v633 = vpack.c.bf16 %v602, %v601
      %v634 = vpack.c.bf16 %v604, %v603
      %v635 = vpack.c.bf16 %v606, %v605
      %v636 = vpack.c.bf16 %v608, %v607
      %v637 = vpack.c.bf16 %v610, %v609
      %v638 = vpack.c.bf16 %v612, %v611
      %v639 = vpack.c.bf16 %v614, %v613
      %v640 = vpack.c.bf16 %v616, %v615
      %v641 = vpack.c.bf16 %v618, %v617
      %v642 = vpack.c.bf16 %v620, %v619
      %v643 = vpack.c.bf16 %v622, %v621
      %v644 = vpack.c.bf16 %v624, %v623
      %v645 = vpack.c.bf16 %v626, %v625
      %v646 = vpack.c.bf16 %v628, %v627
      %v647 = vpack.c.bf16 %v630, %v629
      %v648 = vpack.c.bf16 %v632, %v631
      %v665 = vunpack.c.l.b16 %v633
      %v666 = vunpack.c.h.b16 %v633
      %v667 = vunpack.c.l.b16 %v634
      %v668 = vunpack.c.h.b16 %v634
      %v669 = vunpack.c.l.b16 %v635
      %v670 = vunpack.c.h.b16 %v635
      %v671 = vunpack.c.l.b16 %v636
      %v672 = vunpack.c.h.b16 %v636
      %v673 = vunpack.c.l.b16 %v637
      %v674 = vunpack.c.h.b16 %v637
      %v675 = vunpack.c.l.b16 %v638
      %v676 = vunpack.c.h.b16 %v638
      %v677 = vunpack.c.l.b16 %v639
      %v678 = vunpack.c.h.b16 %v639
      %v679 = vunpack.c.l.b16 %v640
      %v680 = vunpack.c.h.b16 %v640
      %v681 = vunpack.c.l.b16 %v641
      %v682 = vunpack.c.h.b16 %v641
      %v683 = vunpack.c.l.b16 %v642
      %v684 = vunpack.c.h.b16 %v642
      %v685 = vunpack.c.l.b16 %v643
      %v686 = vunpack.c.h.b16 %v643
      %v687 = vunpack.c.l.b16 %v644
      %v688 = vunpack.c.h.b16 %v644
      %v689 = vunpack.c.l.b16 %v645
      %v690 = vunpack.c.h.b16 %v645
      %v691 = vunpack.c.l.b16 %v646
      %v692 = vunpack.c.h.b16 %v646
      %v693 = vunpack.c.l.b16 %v647
      %v694 = vunpack.c.h.b16 %v647
      %v695 = vunpack.c.l.b16 %v648
      %v696 = vunpack.c.h.b16 %v648
      %v697 = vpack.c.b16 %v665, %v665
      %v698 = vpack.c.b16 %v666, %v666
      %v699 = vpack.c.b16 %v667, %v667
      %v700 = vpack.c.b16 %v668, %v668
      %v701 = vpack.c.b16 %v669, %v669
      %v702 = vpack.c.b16 %v670, %v670
      %v703 = vpack.c.b16 %v671, %v671
      %v704 = vpack.c.b16 %v672, %v672
      %v705 = vpack.c.b16 %v673, %v673
      %v706 = vpack.c.b16 %v674, %v674
      %v707 = vpack.c.b16 %v675, %v675
      %v708 = vpack.c.b16 %v676, %v676
      %v709 = vpack.c.b16 %v677, %v677
      %v710 = vpack.c.b16 %v678, %v678
      %v711 = vpack.c.b16 %v679, %v679
      %v712 = vpack.c.b16 %v680, %v680
      %v713 = vpack.c.b16 %v681, %v681
      %v714 = vpack.c.b16 %v682, %v682
      %v715 = vpack.c.b16 %v683, %v683
      %v716 = vpack.c.b16 %v684, %v684
      %v717 = vpack.c.b16 %v685, %v685
      %v718 = vpack.c.b16 %v686, %v686
      %v719 = vpack.c.b16 %v687, %v687
      %v720 = vpack.c.b16 %v688, %v688
      %v721 = vpack.c.b16 %v689, %v689
      %v722 = vpack.c.b16 %v690, %v690
      %v723 = vpack.c.b16 %v691, %v691
      %v724 = vpack.c.b16 %v692, %v692
      %v725 = vpack.c.b16 %v693, %v693
      %v726 = vpack.c.b16 %v694, %v694
      %v727 = vpack.c.b16 %v695, %v695
      %v728 = vpack.c.b16 %v696, %v696
      %761 = vst [vmem:[%s199] sm:$0xf] %v697
      %762 = vst [vmem:[%s199 + $0x4] sm:$0xf] %v698
      %763 = vst [vmem:[%s199 + $0x8] sm:$0xf] %v699
      %764 = vst [vmem:[%s199 + $0xc] sm:$0xf] %v700
      %765 = vst [vmem:[%s199 + $0x10] sm:$0xf] %v701
      %766 = vst [vmem:[%s199 + $0x14] sm:$0xf] %v702
      %767 = vst [vmem:[%s199 + $0x18] sm:$0xf] %v703
      %768 = vst [vmem:[%s199 + $0x1c] sm:$0xf] %v704
      %769 = vst [vmem:[%s199 + $0x20] sm:$0xf] %v705
      %770 = vst [vmem:[%s199 + $0x24] sm:$0xf] %v706
      %771 = vst [vmem:[%s199 + $0x28] sm:$0xf] %v707
      %772 = vst [vmem:[%s199 + $0x2c] sm:$0xf] %v708
      %773 = vst [vmem:[%s199 + $0x30] sm:$0xf] %v709
      %774 = vst [vmem:[%s199 + $0x34] sm:$0xf] %v710
      %775 = vst [vmem:[%s199 + $0x38] sm:$0xf] %v711
      %776 = vst [vmem:[%s199 + $0x3c] sm:$0xf] %v712
      %777 = vst [vmem:[%s199 + $0x40] sm:$0xf] %v713
      %778 = vst [vmem:[%s199 + $0x44] sm:$0xf] %v714
      %779 = vst [vmem:[%s199 + $0x48] sm:$0xf] %v715
      %780 = vst [vmem:[%s199 + $0x4c] sm:$0xf] %v716
      %781 = vst [vmem:[%s199 + $0x50] sm:$0xf] %v717
      %782 = vst [vmem:[%s199 + $0x54] sm:$0xf] %v718
      %783 = vst [vmem:[%s199 + $0x58] sm:$0xf] %v719
      %784 = vst [vmem:[%s199 + $0x5c] sm:$0xf] %v720
      %785 = vst [vmem:[%s199 + $0x60] sm:$0xf] %v721
      %786 = vst [vmem:[%s199 + $0x64] sm:$0xf] %v722
      %787 = vst [vmem:[%s199 + $0x68] sm:$0xf] %v723
      %788 = vst [vmem:[%s199 + $0x6c] sm:$0xf] %v724
      %789 = vst [vmem:[%s199 + $0x70] sm:$0xf] %v725
      %790 = vst [vmem:[%s199 + $0x74] sm:$0xf] %v726
      %791 = vst [vmem:[%s199 + $0x78] sm:$0xf] %v727
      %792 = vst [vmem:[%s199 + $0x7c] sm:$0xf] %v728
      %s793 = smul.u32 32, %s15
      %p794 = scmp.lt.s32.totalorder %s793, 63
      %s795 = scalar_select %p794, %s793, 63
      %s796 = smul.addr %s795, 4
      %s797 = scalar_lea.vmem %s4, %s796
      // Predicated region
      $region37: #{basic_conv2d.1} parent=35 // pred_check
        %p798 = pneg %p122
      $region38: #{basic_conv2d.1} parent=35 // pred_check_branch
        %800 = sbr.rel (%p798) target = $region40
      $region39: #{basic_conv2d.1} parent=35 // pred_region
        %s801 = smul.u32 32, %s15
      $region40: #{basic_conv2d.1} parent=35 // pred_fallthru
        _
    $region36: #{basic_conv2d.1} parent=5 // pred_fallthru
      _
    %p802 = scmp.le.s32.totalorder 2, %s10
    // Predicated region
    $region41: #{basic_conv2d.1} parent=5 // pred_check
      %p803 = pneg %p802
    $region42: #{basic_conv2d.1} parent=5 // pred_check_branch
      %805 = sbr.rel (%p803) target = $region44
    $region43: #{basic_conv2d.1} parent=5 // pred_region
      %s806 = ssub.s32 %s10, 2
      // Predicated region
      $region45: #{basic_conv2d.1} parent=43 // pred_check
        %p807 = pneg %p128
      $region46: #{basic_conv2d.1} parent=43 // pred_check_branch
        %809 = sbr.rel (%p807) target = $region48
      $region47: #{basic_conv2d.1} parent=43 // pred_region
        %s810 = smul.u32 32, %s16
        %p811 = scmp.lt.s32.totalorder %s810, 63
        %s812 = scalar_select %p811, %s810, 63
        %s813 = smul.addr %s812, 4
        %s814 = scalar_lea.vmem %s4, %s813
      $region48: #{basic_conv2d.1} parent=43 // pred_fallthru
        _
    $region44: #{basic_conv2d.1} parent=5 // pred_fallthru
      _
  $region6: #{basic_conv2d.1} parent=0 // loop_footer
    %s14 = sadd.s32 1, %s10
  $region7: #{basic_conv2d.1} parent=0 // loop_footer_branch
    %9 = sbr.rel target = $region3
  $region8: #{basic_conv2d.1} parent=0 // loop_exit
    _

</llo_original>
